<compile_context>
chip_gen: v7x
topology: tpu7x:2x2x1
jax: 0.10.0
libtpu: 0.0.40
codegen_flags: <defaults>
</compile_context>

<pallas_src>
import jax
import jax.numpy as jnp
from jax import lax
from jax.experimental import pallas as pl
from jax.experimental.pallas import tpu as pltpu

LOG_STD_MIN = -20.0
LOG_STD_MAX = 2.0


def _tg2_kernel(x_ref, w_ref, b_ref, out_ref):
    # x: (TB, K), w: (2N, K)  (PyTorch Linear layout, no host transpose), b: (1, 2N)
    x = x_ref[...]
    y = lax.dot_general(
        x, w_ref[...],
        dimension_numbers=(((1,), (1,)), ((), ())),   # contract K with K
        preferred_element_type=jnp.float32,
    )
    y = y + b_ref[...]                                # broadcast (1, 2N)

    n = y.shape[-1] // 2
    mean = y[:, :n]
    log_std = jnp.clip(y[:, n:], LOG_STD_MIN, LOG_STD_MAX)
    std = jnp.exp(log_std)                            # EUP
    mode = jnp.tanh(mean)                             # EUP

    # single lane-dense slab: [mean | std | log_std | mode]
    out_ref[...] = jnp.concatenate([mean, std, log_std, mode], axis=-1)


def _round_up(v, m):
    return (v + m - 1) // m * m


def transformed_gaussian2_forward(actor_feat, w_mean, b_mean, w_logstd, b_logstd,
                                  *, block_b=2048):
    """actor_feat: [B, K]; w_*: [N, K] (PyTorch Linear layout); b_*: [N]."""
    B, K = actor_feat.shape
    N = w_mean.shape[0]

    x = jnp.asarray(actor_feat, jnp.float32)
    # Fused heads, still in (out, in) layout -> (2N, K); no transpose copy.
    w_cat = jnp.concatenate(
        [jnp.asarray(w_mean, jnp.float32), jnp.asarray(w_logstd, jnp.float32)], axis=0)
    b_cat = jnp.concatenate(
        [jnp.asarray(b_mean, jnp.float32), jnp.asarray(b_logstd, jnp.float32)],
        axis=0).reshape(1, 2 * N)

    # Batch tile: big enough to pipeline well, small case stays a single block.
    TB = min(block_b, _round_up(B, 8))
    B_pad = _round_up(B, TB)
    if B_pad != B:
        x = jnp.pad(x, ((0, B_pad - B), (0, 0)))

    out = pl.pallas_call(
        _tg2_kernel,
        out_shape=jax.ShapeDtypeStruct((B_pad, 4 * N), jnp.float32),
        grid=(B_pad // TB,),
        in_specs=[
            pl.BlockSpec((TB, K), lambda i: (i, 0)),        # activations, tiled on batch
            pl.BlockSpec((2 * N, K), lambda i: (0, 0)),     # fused weights, VMEM-resident
            pl.BlockSpec((1, 2 * N), lambda i: (0, 0)),     # fused bias, VMEM-resident
        ],
        out_specs=pl.BlockSpec((TB, 4 * N), lambda i: (i, 0)),
        compiler_params=pltpu.CompilerParams(
            dimension_semantics=("parallel",)),             # megacore on v7x
    )(x, w_cat, b_cat)

    mean = out[:B, 0:N]
    std = out[:B, N:2 * N]
    log_std = out[:B, 2 * N:3 * N]
    mode = out[:B, 3 * N:4 * N]
    return mean, std, log_std, mode


def _orthogonal(key, rows, cols):
    # deterministic orthogonal init (stand-in for nn.init.orthogonal_)
    return jax.nn.initializers.orthogonal()(key, (rows, cols), jnp.float32)


if __name__ == "__main__":
    B, num_inputs, num_outputs = 8, 32, 8

    key = jax.random.PRNGKey(0)
    k_x, k_wm, k_ws = jax.random.split(key, 3)

    actor_feat = jax.random.normal(k_x, (B, num_inputs), jnp.float32)

    # PyTorch Linear layout: weight [num_outputs, num_inputs], bias [num_outputs]
    w_mean = _orthogonal(k_wm, num_outputs, num_inputs)
    b_mean = jnp.zeros((num_outputs,), jnp.float32)
    w_logstd = _orthogonal(k_ws, num_outputs, num_inputs)
    b_logstd = jnp.zeros((num_outputs,), jnp.float32)

    mean, std, log_std, mode = transformed_gaussian2_forward(
        actor_feat, w_mean, b_mean, w_logstd, b_logstd)
    jax.block_until_ready((mean, std, log_std, mode))

    # sanity check against plain JAX reference
    ref_mean = actor_feat @ w_mean.T + b_mean
    ref_logstd = jnp.clip(actor_feat @ w_logstd.T + b_logstd, LOG_STD_MIN, LOG_STD_MAX)
    assert jnp.allclose(mean, ref_mean, atol=2e-5)
    assert jnp.allclose(log_std, ref_logstd, atol=2e-5)
    assert jnp.allclose(std, jnp.exp(ref_logstd), atol=2e-5)
    assert jnp.allclose(mode, jnp.tanh(ref_mean), atol=2e-5)

    print("KERNEL_OK")
</pallas_src>

<mosaic_0001>
module attributes {stable_mosaic.version = 11 : i64} {
  func.func @_tg2_kernel(%arg0: i32, %arg1: memref<8x32xf32, #tpu.memory_space<vmem>>, %arg2: memref<16x32xf32, #tpu.memory_space<vmem>>, %arg3: memref<1x16xf32, #tpu.memory_space<vmem>>, %arg4: memref<8x32xf32, #tpu.memory_space<vmem>>) attributes {dimension_semantics = [#tpu.dimension_semantics<parallel>], iteration_bounds = array<i64: 1>, scalar_prefetch = 0 : i64, scratch_operands = 0 : i64, tpu.core_type = #tpu.core_type<tc>, window_params = [{transform_indices = @transform_0, window_bounds = array<i64: 8, 32>}, {pipeline_mode = #tpu.pipeline_mode<synchronous>, transform_indices = @transform_1, window_bounds = array<i64: 16, 32>}, {pipeline_mode = #tpu.pipeline_mode<synchronous>, transform_indices = @transform_2, window_bounds = array<i64: 1, 16>}, {transform_indices = @transform_3, window_bounds = array<i64: 8, 32>}]} {
    %c0 = arith.constant 0 : index
    %c0_0 = arith.constant 0 : index
    %0 = vector.load %arg1[%c0, %c0_0] : memref<8x32xf32, #tpu.memory_space<vmem>>, vector<8x32xf32>
    %c0_1 = arith.constant 0 : index
    %c0_2 = arith.constant 0 : index
    %1 = vector.load %arg2[%c0_1, %c0_2] : memref<16x32xf32, #tpu.memory_space<vmem>>, vector<16x32xf32>
    %cst = arith.constant dense<0.000000e+00> : vector<8x16xf32>
    %2 = tpu.matmul %0, %1, %cst {dimension_numbers = #tpu.dot_dimension_numbers<[1], [1], [0], [0], [0, 0, 1, 0], [], []>} : vector<8x32xf32>, vector<16x32xf32>, vector<8x16xf32> -> vector<8x16xf32>
    %c0_3 = arith.constant 0 : index
    %c0_4 = arith.constant 0 : index
    %3 = vector.load %arg3[%c0_3, %c0_4] : memref<1x16xf32, #tpu.memory_space<vmem>>, vector<1x16xf32>
    %4 = vector.broadcast %3 : vector<1x16xf32> to vector<8x16xf32>
    %5 = arith.addf %2, %4 : vector<8x16xf32>
    %6 = vector.extract_strided_slice %5 {offsets = [0, 0], sizes = [8, 8], strides = [1, 1]} : vector<8x16xf32> to vector<8x8xf32>
    %7 = vector.extract_strided_slice %5 {offsets = [0, 8], sizes = [8, 8], strides = [1, 1]} : vector<8x16xf32> to vector<8x8xf32>
    %cst_5 = arith.constant -2.000000e+01 : f32
    %cst_6 = arith.constant 2.000000e+00 : f32
    %8 = vector.broadcast %cst_5 : f32 to vector<8x8xf32>
    %9 = arith.maximumf %8, %7 : vector<8x8xf32>
    %10 = vector.broadcast %cst_6 : f32 to vector<8x8xf32>
    %11 = arith.minimumf %10, %9 : vector<8x8xf32>
    %12 = math.exp %11 : vector<8x8xf32>
    %13 = math.tanh %6 : vector<8x8xf32>
    %14 = tpu.concatenate %6, %12, %11, %13 in 1 : vector<8x8xf32>, vector<8x8xf32>, vector<8x8xf32>, vector<8x8xf32> -> vector<8x32xf32>
    %c0_7 = arith.constant 0 : index
    %c0_8 = arith.constant 0 : index
    %15 = vector.load %arg4[%c0_7, %c0_8] : memref<8x32xf32, #tpu.memory_space<vmem>>, vector<8x32xf32>
    tpu.vector_store %arg4[%c0_7, %c0_8], %14 {strides = array<i32>} : memref<8x32xf32, #tpu.memory_space<vmem>>, vector<8x32xf32>,
    return
  }
  func.func @transform_0(%arg0: i32) -> (i32, i32) {
    %c0_i32 = arith.constant 0 : i32
    %c0_i32_0 = arith.constant 0 : i32
    return %arg0, %c0_i32 : i32, i32
  }
  func.func @transform_1(%arg0: i32) -> (i32, i32) {
    %c0_i32 = arith.constant 0 : i32
    %c0_i32_0 = arith.constant 0 : i32
    %c0_i32_1 = arith.constant 0 : i32
    return %c0_i32, %c0_i32_0 : i32, i32
  }
  func.func @transform_2(%arg0: i32) -> (i32, i32) {
    %c0_i32 = arith.constant 0 : i32
    %c0_i32_0 = arith.constant 0 : i32
    %c0_i32_1 = arith.constant 0 : i32
    return %c0_i32, %c0_i32_0 : i32, i32
  }
  func.func @transform_3(%arg0: i32) -> (i32, i32) {
    %c0_i32 = arith.constant 0 : i32
    %c0_i32_0 = arith.constant 0 : i32
    return %arg0, %c0_i32 : i32, i32
  }
}

</mosaic_0001>

<llo_original>
// kernel: tpu_custom_call.1
$region0: #{tpu_custom_call.1}
  #allocation0 [shape = 'u32[]', space=smem, size = 0x4, offset = 0x4, fixed_abs, tag = 'smem constant byte address 0x4 - core index']
  #allocation1 [shape = 'u32[144,128]{1,0:T(1,128)}', space=vmem, size = 0x12000, scoped, tag = 'internal scratch']
  %s0 = inlined_call_operand.hbm [shape: f32[8,32], index: 0, kind: input, shape index: {}]
  %s1 = inlined_call_operand.hbm [shape: f32[16,32], index: 1, kind: input, shape index: {}]
  %s2 = inlined_call_operand.vmem [shape: f32[1,16], index: 2, kind: input, shape index: {}]
  %s3 = inlined_call_operand.hbm [shape: f32[8,32], index: 3, kind: output, shape index: {}]
  %s4 = sld [smem:[#allocation0]]
  $region30: #{tpu_custom_call.1} parent=0
    _
  %s6 = ssub.s32 1, %s4
  %s7 = scalar_select 0, %s6, %s4
  $region1: #{tpu_custom_call.1} parent=0
    #allocation2 [shape = 'u8[4096]{0}', space=vmem, size = 0x1000, scoped, tag = 'input window, operand 0, single buffered']
    #allocation3 [shape = 's32[1]{0}', space=sflag, size = 0x4, scoped, tag = 'scoped memory for tpu_custom_call.1']
    #allocation4 [shape = 's32[1]{0}', space=sflag, size = 0x4, scoped, tag = 'scoped memory for tpu_custom_call.1']
    #allocation5 [shape = 'u8[8192]{0}', space=vmem, size = 0x2000, scoped, tag = 'input window, operand 1, single buffered']
    #allocation6 [shape = 's32[1]{0}', space=sflag, size = 0x4, scoped, tag = 'scoped memory for tpu_custom_call.1']
    #allocation7 [shape = 'u8[4096]{0}', space=vmem, size = 0x1000, scoped, tag = 'output window, operand 0, single buffered']
    %8 = vsyncpa [#allocation3], 0
    %9 = vsyncpa [#allocation6], 0
    %10 = vsyncpa [#allocation4], 0
    // Predicated region
    $region2: #{tpu_custom_call.1} parent=1 // pred_check
      _
    $region3: #{tpu_custom_call.1} parent=1 // pred_check_branch
      %12 = sbr.rel (0) target = $region5
    $region4: #{tpu_custom_call.1} parent=1 // pred_region
      %s14 = ssub.s32 128, 128
      %15 = vsyncadd [#allocation3], %s14
      %s17 = sshll.u32 [#allocation2], 4
      %s18 = int_to_ptr.vmem [resolvable:$true] %s17
      %20 = dma.hbm_to_vmem [thread:$0]  %s0, 128, %s18, [#allocation3]
    $region5: #{tpu_custom_call.1} parent=1 // pred_fallthru
      _
    // Predicated region
    $region6: #{tpu_custom_call.1} parent=1 // pred_check
      _
    $region7: #{tpu_custom_call.1} parent=1 // pred_check_branch
      %22 = sbr.rel (0) target = $region9
    $region8: #{tpu_custom_call.1} parent=1 // pred_region
      %s24 = ssub.s32 256, 256
      %25 = vsyncadd [#allocation6], %s24
      %s26 = sshll.u32 [#allocation5], 4
      %s27 = int_to_ptr.vmem [resolvable:$true] %s26
      %32 = dma.hbm_to_vmem [thread:$0]  %s1, 256, %s27, [#allocation6], 128, 128, 8
    $region9: #{tpu_custom_call.1} parent=1 // pred_fallthru
      _
    // Predicated region
    $region10: #{tpu_custom_call.1} parent=1 // pred_check
      _
    $region11: #{tpu_custom_call.1} parent=1 // pred_check_branch
      %34 = sbr.rel (0) target = $region13
    $region12: #{tpu_custom_call.1} parent=1 // pred_region
      _
    $region13: #{tpu_custom_call.1} parent=1 // pred_fallthru
      _
    // Predicated region
    $region14: #{tpu_custom_call.1} parent=1 // pred_check
      _
    $region15: #{tpu_custom_call.1} parent=1 // pred_check_branch
      %36 = sbr.rel (0) target = $region17
    $region16: #{tpu_custom_call.1} parent=1 // pred_region
      %37 = dma.done [#allocation3], 128
    $region17: #{tpu_custom_call.1} parent=1 // pred_fallthru
      _
    // Predicated region
    $region18: #{tpu_custom_call.1} parent=1 // pred_check
      _
    $region19: #{tpu_custom_call.1} parent=1 // pred_check_branch
      %39 = sbr.rel (0) target = $region21
    $region20: #{tpu_custom_call.1} parent=1 // pred_region
      %40 = dma.done [#allocation6], 256
    $region21: #{tpu_custom_call.1} parent=1 // pred_fallthru
      _
    %v41 = vld [vmem:[#allocation2] sm:$0xff]
    %v42 = vld [vmem:[#allocation5] sm:$0xff]
    %v43 = vld [vmem:[#allocation5 + $0x8] sm:$0xff]
    %v44 = vld [vmem:[%s2] sm:$0x1]
    %v46 = vlaneseq
    %v47 = vshrl.u32 %v46, 7
    %v48 = vsub.s32 0, %v47
    %v49 = vrot.slane %v44, %v48
    %vm51 = vcmask 261120
    %v53 = vsel %vm51, %v41, 0
    %v56 = vsel %vm51, %v42, 0
    %v59 = vsel %vm51, %v43, 0
    %61 = vmatprep.subr.mxu0 0.0
    %62 = vmatpush1.xpose.msra.mxu0 %v56
    %63 = vmatprep.subr.mxu0 0.0
    %64 = vmatpush1.xpose.msra.mxu0 %v59
    %65 = vmatprep.subr.mxu0 0.0
    %66 = vmatpush1.xpose.msra.mxu0 0.0
    %67 = vmatprep.subr.mxu0 0.0
    %68 = vmatpush1.xpose.msra.mxu0 0.0
    %69 = vmatprep.subr.mxu0 0.0
    %70 = vmatpush1.xpose.msra.mxu0 0.0
    %71 = vmatprep.subr.mxu0 0.0
    %72 = vmatpush1.xpose.msra.mxu0 0.0
    %73 = vmatprep.subr.mxu0 0.0
    %74 = vmatpush1.xpose.msra.mxu0 0.0
    %75 = vmatprep.subr.mxu0 0.0
    %76 = vmatpush1.xpose.msra.mxu0 0.0
    %77 = vmatprep.subr.mxu0 0.0
    %78 = vmatpush1.xpose.msra.mxu0 0.0
    %79 = vmatprep.subr.mxu0 0.0
    %80 = vmatpush1.xpose.msra.mxu0 0.0
    %81 = vmatprep.subr.mxu0 0.0
    %82 = vmatpush1.xpose.msra.mxu0 0.0
    %83 = vmatprep.subr.mxu0 0.0
    %84 = vmatpush1.xpose.msra.mxu0 0.0
    %85 = vmatprep.subr.mxu0 0.0
    %86 = vmatpush1.xpose.msra.mxu0 0.0
    %87 = vmatprep.subr.mxu0 0.0
    %88 = vmatpush1.xpose.msra.mxu0 0.0
    %89 = vmatprep.subr.mxu0 0.0
    %90 = vmatpush1.xpose.msra.mxu0 0.0
    %91 = vmatprep.subr.mxu0 0.0
    %92 = vmatpush1.xpose.msra.mxu0 0.0
    %93 = vmatprep.subr.mxu0 0.0
    %94 = vmatpush1.xpose.msra.mxu0 0.0
    %95 = vmatprep.subr.mxu0 0.0
    %96 = vmatpush1.xpose.msra.mxu0 0.0
    %97 = vmatprep.subr.mxu0 0.0
    %98 = vmatpush1.xpose.msra.mxu0 0.0
    %99 = vmatprep.subr.mxu0 0.0
    %100 = vmatpush1.xpose.msra.mxu0 0.0
    %101 = vmatprep.subr.mxu0 0.0
    %102 = vmatpush1.xpose.msra.mxu0 0.0
    %103 = vmatprep.subr.mxu0 0.0
    %104 = vmatpush1.xpose.msra.mxu0 0.0
    %105 = vmatprep.subr.mxu0 0.0
    %106 = vmatpush1.xpose.msra.mxu0 0.0
    %107 = vmatprep.subr.mxu0 0.0
    %108 = vmatpush1.xpose.msra.mxu0 0.0
    %109 = vmatprep.subr.mxu0 0.0
    %110 = vmatpush1.xpose.msra.mxu0 0.0
    %111 = vmatprep.subr.mxu0 0.0
    %112 = vmatpush1.xpose.msra.mxu0 0.0
    %113 = vmatprep.subr.mxu0 0.0
    %114 = vmatpush1.xpose.msra.mxu0 0.0
    %115 = vmatprep.subr.mxu0 0.0
    %116 = vmatpush1.xpose.msra.mxu0 0.0
    %117 = vmatprep.subr.mxu0 0.0
    %118 = vmatpush1.xpose.msra.mxu0 0.0
    %119 = vmatprep.subr.mxu0 0.0
    %120 = vmatpush1.xpose.msra.mxu0 0.0
    %121 = vmatprep.subr.mxu0 0.0
    %122 = vmatpush1.xpose.msra.mxu0 0.0
    %123 = vmatprep.subr.mxu0 0.0
    %124 = vmatpush1.xpose.msra.mxu0 0.0
    %125 = vmatprep.mubr.f32.mxu0 0.0
    %126 = vmatmul.mubr.f32.gmra.mrb[0].mxu0 %v53
    %v127 = vpop.f32.mrb[0].mxu0
    %v128 = vadd.f32 %v49, %v127
    %v129 = vpop.f32.mrb[0].mxu0
    %130 = vdwg.mxu0
    %v131 = vmax.f32 %v128, -20.0
    %v132 = vmin.f32 %v131, 2.0
    %v133 = vmul.f32 %v132, 1.442695
    %v134 = vpow.pop %v133
    %v135 = vtanh.pop %v128
    %137 = vrot.lane.b32.xlu0 %v132, 8
    %v138 = vpop.permute.xlu0 %137
    %141 = vrot.lane.b32.xlu0 %v135, 24
    %v142 = vpop.permute.xlu0 %141
    %vm144 = vcmask 64512
    %v145 = vsel %vm144, %v128, %v134
    %vm146 = vcmask 130048
    %v147 = vsel %vm146, %v145, %v138
    %vm148 = vcmask 195584
    %v149 = vsel %vm148, %v147, %v142
    %150 = vst.msk [vmem:[#allocation7] sm:$0xff] %vm51, %v149
    // Predicated region
    $region22: #{tpu_custom_call.1} parent=1 // pred_check
      _
    $region23: #{tpu_custom_call.1} parent=1 // pred_check_branch
      %152 = sbr.rel (0) target = $region25
    $region24: #{tpu_custom_call.1} parent=1 // pred_region
      %s154 = ssub.s32 128, 128
      %155 = vsyncadd [#allocation4], %s154
      %s157 = sshll.u32 [#allocation7], 4
      %s158 = int_to_ptr.vmem [resolvable:$true] %s157
      %160 = dma.vmem_to_hbm [thread:$0]  %s158, 128, %s3, [#allocation4]
    $region25: #{tpu_custom_call.1} parent=1 // pred_fallthru
      _
    // Predicated region
    $region26: #{tpu_custom_call.1} parent=1 // pred_check
      _
    $region27: #{tpu_custom_call.1} parent=1 // pred_check_branch
      %162 = sbr.rel (0) target = $region29
    $region28: #{tpu_custom_call.1} parent=1 // pred_region
      %163 = dma.done [#allocation4], 128
    $region29: #{tpu_custom_call.1} parent=1 // pred_fallthru
      _
    %164 = vsyncpa [#allocation3], 1
    %165 = vsyncpa [#allocation6], 1
    %166 = vsyncpa [#allocation4], 1

</llo_original>
